<compile_context>
chip_gen: v7x
topology: tpu7x:2x2x1
jax: 0.10.0
libtpu: 0.0.40
codegen_flags: <defaults>
</compile_context>

<pallas_src>
import functools

import jax
import jax.numpy as jnp
from jax.experimental import pallas as pl
from jax.experimental.pallas import tpu as pltpu


def _round_up(v, m):
    return (v + m - 1) // m * m


def network_kernel(x_ref, w1t_ref, b1_ref, w23t_ref, b23_ref, ut_ref, kt_ref,
                   ehat_ref, rhat_ref, evar_ref, rvar_ref):
    bt, dp = x_ref.shape  # static block shape

    x = x_ref[...]

    # --- selector: h = sigmoid(l1(x)); [select | var] = h @ [W2^T | W3^T] + [b2 | b3]
    h = jax.nn.sigmoid(
        jnp.dot(x, w1t_ref[...], preferred_element_type=jnp.float32) + b1_ref[...])
    sv = jnp.dot(h, w23t_ref[...], preferred_element_type=jnp.float32) + b23_ref[...]

    # Stack the mean / variance heads along the batch axis -> one pass through
    # the MXU for the two large matmuls (better occupancy for small batch tiles).
    stacked = jnp.concatenate([sv[:, :dp], sv[:, dp:]], axis=0)        # (2*bt, dp)

    # --- Rhat / Rhat_var and the single E-projection ---
    r = jnp.exp(jnp.dot(stacked, ut_ref[...], preferred_element_type=jnp.float32))
    e0 = jnp.dot(r, kt_ref[...], preferred_element_type=jnp.float32)   # (2*bt, dp)

    # Per-row correction term = column 0 of the projection; normalize by
    # reciprocal-multiply.  (Rhat/corr) @ kern^T == (Rhat @ kern^T)/corr, so the
    # re-projection matmuls of the original code are not needed.
    inv = pl.reciprocal(e0[:, 0:1], approx=False)                       # (2*bt, 1)
    r = r * inv
    e = e0 * inv

    rhat_ref[...] = r[:bt]
    rvar_ref[...] = r[bt:]
    ehat_ref[...] = e[:bt]
    evar_ref[...] = e[bt:]


@functools.partial(jax.jit, static_argnames=("batch_tile",))
def network_forward(x, w1, b1, w2, b2, w3, b3, U, kern, *, batch_tile=None):
    """x: (B, D_E). w*: PyTorch-layout Linear weights (out, in). U: (N_R, D_E).
    kern: (D_E, N_R).  Returns (Ehat, Rhat, Ehat_var, Rhat_var), all float32."""
    f32 = jnp.float32
    B, D = x.shape
    N = kern.shape[1]

    # --- pad feature dims to lane multiples, pick a batch tile -------------
    Dp = _round_up(D, 128)
    Np = _round_up(N, 128)
    if batch_tile is None:
        batch_tile = min(256, _round_up(B, 8))
    Bt = _round_up(min(batch_tile, _round_up(B, 8)), 8)
    Bp = _round_up(B, Bt)
    grid_b = Bp // Bt

    def pad2(a, r, c):
        a = a.astype(f32)
        return jnp.pad(a, ((0, r - a.shape[0]), (0, c - a.shape[1])))

    x_p = pad2(x, Bp, Dp)
    w1t = pad2(w1.T, Dp, Dp)
    b1r = pad2(b1.reshape(1, D), 1, Dp)
    # Fused l2/l3 head: (Dp, 2*Dp) weight, (1, 2*Dp) bias.
    w23t = jnp.concatenate([pad2(w2.T, Dp, Dp), pad2(w3.T, Dp, Dp)], axis=1)
    b23r = jnp.concatenate([pad2(b2.reshape(1, D), 1, Dp),
                            pad2(b3.reshape(1, D), 1, Dp)], axis=1)
    ut = pad2(U.T, Dp, Np)      # (Dp, Np) == U^T   (zero-padded cols -> exp(0)=1,
    kt = pad2(kern.T, Np, Dp)   # (Np, Dp) == kern^T; zero rows kill their effect)

    const = lambda shape: pl.BlockSpec(shape, lambda i: (0, 0))
    batched = lambda shape: pl.BlockSpec(shape, lambda i: (i, 0))

    out_shapes = (
        jax.ShapeDtypeStruct((Bp, Dp), f32),   # Ehat
        jax.ShapeDtypeStruct((Bp, Np), f32),   # Rhat
        jax.ShapeDtypeStruct((Bp, Dp), f32),   # Ehat_var
        jax.ShapeDtypeStruct((Bp, Np), f32),   # Rhat_var
    )

    cost = pl.CostEstimate(
        flops=2 * Bp * Dp * Dp          # l1
        + 2 * Bp * Dp * (2 * Dp)        # fused l2/l3
        + 2 * (2 * Bp) * Dp * Np        # stacked @ U^T
        + 2 * (2 * Bp) * Np * Dp,       # r @ kern^T
        transcendentals=Bp * Dp + 2 * Bp * Np,
        bytes_accessed=4 * (Bp * Dp + Dp * Dp + Dp + 2 * Dp * Dp + 2 * Dp
                            + Dp * Np + Np * Dp + 2 * Bp * Dp + 2 * Bp * Np),
    )

    ehat, rhat, evar, rvar = pl.pallas_call(
        network_kernel,
        out_shape=out_shapes,
        grid=(grid_b,),
        in_specs=[
            batched((Bt, Dp)),                      # x        (tiled over batch)
            const((Dp, Dp)), const((1, Dp)),        # l1       (VMEM-resident)
            const((Dp, 2 * Dp)), const((1, 2 * Dp)),  # fused l2|l3
            const((Dp, Np)),                        # U^T
            const((Np, Dp)),                        # kern^T
        ],
        out_specs=(batched((Bt, Dp)), batched((Bt, Np)),
                   batched((Bt, Dp)), batched((Bt, Np))),
        compiler_params=pltpu.CompilerParams(
            dimension_semantics=("parallel",),
            vmem_limit_bytes=32 << 20,
        ),
        cost_estimate=cost,
    )(x_p, w1t, b1r, w23t, b23r, ut, kt)

    # slice padding off
    return (ehat[:B, :D], rhat[:B, :N], evar[:B, :D], rvar[:B, :N])


def network_forward_ref(x, w1, b1, w2, b2, w3, b3, U, kern):
    f32 = jnp.float32
    x = x.astype(f32)
    h = jax.nn.sigmoid(x @ w1.T + b1)
    select = h @ w2.T + b2
    var = h @ w3.T + b3
    rhat = jnp.exp(select @ U.T)
    rvar = jnp.exp(var @ U.T)
    corr = (rhat @ kern.T)[:, 0:1]
    corr_v = (rvar @ kern.T)[:, 0:1]
    rhat = rhat / corr
    rvar = rvar / corr_v
    return rhat @ kern.T, rhat, rvar @ kern.T, rvar


if __name__ == "__main__":
    # Small shapes consistent with the module (original: D_E=151, N_R=2000).
    # Deliberately non-lane-aligned to exercise the padding path, and a batch
    # tile smaller than B to exercise the batch grid.
    B, D, N = 40, 64, 200

    key = jax.random.PRNGKey(0)
    ks = jax.random.split(key, 9)
    f32 = jnp.float32

    x = jax.random.normal(ks[0], (B, D), dtype=f32)

    # Linear layers (PyTorch layout: weight (out, in), bias (out,))
    w1 = 0.05 * jax.random.normal(ks[1], (D, D), dtype=f32)
    b1 = 0.05 * jax.random.normal(ks[2], (D,), dtype=f32)
    w2 = 0.05 * jax.random.normal(ks[3], (D, D), dtype=f32)
    b2 = 0.05 * jax.random.normal(ks[4], (D,), dtype=f32)
    w3 = 0.05 * jax.random.normal(ks[5], (D, D), dtype=f32)
    b3 = 0.05 * jax.random.normal(ks[6], (D,), dtype=f32)

    # kern (D_E, N_R) positive; U = V from SVD(kern) (torch.svd returns V)
    kern = jax.random.uniform(ks[7], (D, N), dtype=f32, minval=0.1, maxval=1.0)
    _, _, vh = jnp.linalg.svd(kern, full_matrices=False)
    U = vh.T                       # (N, D) == V, matching self.U = vh of torch.svd

    outs = network_forward(x, w1, b1, w2, b2, w3, b3, U, kern, batch_tile=16)
    outs = jax.block_until_ready(outs)

    refs = network_forward_ref(x, w1, b1, w2, b2, w3, b3, U, kern)
    names = ("Ehat", "Rhat", "Ehat_var", "Rhat_var")
    for name, o, r in zip(names, outs, refs):
        assert o.shape == r.shape and o.dtype == r.dtype, name
        assert jnp.allclose(o, r, rtol=1e-4, atol=1e-4), f"mismatch vs JAX reference: {name}"

    print("KERNEL_OK")
</pallas_src>

<mosaic_0001>
module attributes {stable_mosaic.version = 11 : i64} {
  func.func @network_kernel(%arg0: i32, %arg1: memref<16x128xf32, #tpu.memory_space<vmem>>, %arg2: memref<128x128xf32, #tpu.memory_space<vmem>>, %arg3: memref<1x128xf32, #tpu.memory_space<vmem>>, %arg4: memref<128x256xf32, #tpu.memory_space<vmem>>, %arg5: memref<1x256xf32, #tpu.memory_space<vmem>>, %arg6: memref<128x256xf32, #tpu.memory_space<vmem>>, %arg7: memref<256x128xf32, #tpu.memory_space<vmem>>, %arg8: memref<16x128xf32, #tpu.memory_space<vmem>>, %arg9: memref<16x256xf32, #tpu.memory_space<vmem>>, %arg10: memref<16x128xf32, #tpu.memory_space<vmem>>, %arg11: memref<16x256xf32, #tpu.memory_space<vmem>>) attributes {dimension_semantics = [#tpu.dimension_semantics<parallel>], iteration_bounds = array<i64: 3>, scalar_prefetch = 0 : i64, scratch_operands = 0 : i64, tpu.core_type = #tpu.core_type<tc>, window_params = [{transform_indices = @transform_0, window_bounds = array<i64: 16, 128>}, {pipeline_mode = #tpu.pipeline_mode<synchronous>, transform_indices = @transform_1, window_bounds = array<i64: 128, 128>}, {pipeline_mode = #tpu.pipeline_mode<synchronous>, transform_indices = @transform_2, window_bounds = array<i64: 1, 128>}, {pipeline_mode = #tpu.pipeline_mode<synchronous>, transform_indices = @transform_3, window_bounds = array<i64: 128, 256>}, {pipeline_mode = #tpu.pipeline_mode<synchronous>, transform_indices = @transform_4, window_bounds = array<i64: 1, 256>}, {pipeline_mode = #tpu.pipeline_mode<synchronous>, transform_indices = @transform_5, window_bounds = array<i64: 128, 256>}, {pipeline_mode = #tpu.pipeline_mode<synchronous>, transform_indices = @transform_6, window_bounds = array<i64: 256, 128>}, {transform_indices = @transform_7, window_bounds = array<i64: 16, 128>}, {transform_indices = @transform_8, window_bounds = array<i64: 16, 256>}, {transform_indices = @transform_9, window_bounds = array<i64: 16, 128>}, {transform_indices = @transform_10, window_bounds = array<i64: 16, 256>}]} {
    %c0 = arith.constant 0 : index
    %c0_0 = arith.constant 0 : index
    %0 = vector.load %arg1[%c0, %c0_0] : memref<16x128xf32, #tpu.memory_space<vmem>>, vector<16x128xf32>
    %c0_1 = arith.constant 0 : index
    %c0_2 = arith.constant 0 : index
    %1 = vector.load %arg2[%c0_1, %c0_2] : memref<128x128xf32, #tpu.memory_space<vmem>>, vector<128x128xf32>
    %cst = arith.constant dense<0.000000e+00> : vector<16x128xf32>
    %2 = tpu.matmul %0, %1, %cst {dimension_numbers = #tpu.dot_dimension_numbers<[1], [0], [0], [1], [0, 0, 1, 1], [], []>} : vector<16x128xf32>, vector<128x128xf32>, vector<16x128xf32> -> vector<16x128xf32>
    %c0_3 = arith.constant 0 : index
    %c0_4 = arith.constant 0 : index
    %3 = vector.load %arg3[%c0_3, %c0_4] : memref<1x128xf32, #tpu.memory_space<vmem>>, vector<1x128xf32>
    %4 = vector.broadcast %3 : vector<1x128xf32> to vector<16x128xf32>
    %5 = arith.addf %2, %4 : vector<16x128xf32>
    %6 = arith.negf %5 : vector<16x128xf32>
    %7 = math.exp %6 : vector<16x128xf32>
    %cst_5 = arith.constant 1.000000e+00 : f32
    %8 = vector.broadcast %cst_5 : f32 to vector<16x128xf32>
    %9 = arith.addf %8, %7 : vector<16x128xf32>
    %10 = arith.divf %8, %9 : vector<16x128xf32>
    %c0_6 = arith.constant 0 : index
    %c0_7 = arith.constant 0 : index
    %11 = vector.load %arg4[%c0_6, %c0_7] : memref<128x256xf32, #tpu.memory_space<vmem>>, vector<128x256xf32>
    %cst_8 = arith.constant dense<0.000000e+00> : vector<16x256xf32>
    %12 = tpu.matmul %10, %11, %cst_8 {dimension_numbers = #tpu.dot_dimension_numbers<[1], [0], [0], [1], [0, 0, 1, 1], [], []>} : vector<16x128xf32>, vector<128x256xf32>, vector<16x256xf32> -> vector<16x256xf32>
    %c0_9 = arith.constant 0 : index
    %c0_10 = arith.constant 0 : index
    %13 = vector.load %arg5[%c0_9, %c0_10] : memref<1x256xf32, #tpu.memory_space<vmem>>, vector<1x256xf32>
    %14 = vector.broadcast %13 : vector<1x256xf32> to vector<16x256xf32>
    %15 = arith.addf %12, %14 : vector<16x256xf32>
    %16 = vector.extract_strided_slice %15 {offsets = [0, 0], sizes = [16, 128], strides = [1, 1]} : vector<16x256xf32> to vector<16x128xf32>
    %17 = vector.extract_strided_slice %15 {offsets = [0, 128], sizes = [16, 128], strides = [1, 1]} : vector<16x256xf32> to vector<16x128xf32>
    %18 = tpu.concatenate %16, %17 in 0 : vector<16x128xf32>, vector<16x128xf32> -> vector<32x128xf32>
    %c0_11 = arith.constant 0 : index
    %c0_12 = arith.constant 0 : index
    %19 = vector.load %arg6[%c0_11, %c0_12] : memref<128x256xf32, #tpu.memory_space<vmem>>, vector<128x256xf32>
    %cst_13 = arith.constant dense<0.000000e+00> : vector<32x256xf32>
    %20 = tpu.matmul %18, %19, %cst_13 {dimension_numbers = #tpu.dot_dimension_numbers<[1], [0], [0], [1], [0, 0, 1, 1], [], []>} : vector<32x128xf32>, vector<128x256xf32>, vector<32x256xf32> -> vector<32x256xf32>
    %21 = math.exp %20 : vector<32x256xf32>
    %c0_14 = arith.constant 0 : index
    %c0_15 = arith.constant 0 : index
    %22 = vector.load %arg7[%c0_14, %c0_15] : memref<256x128xf32, #tpu.memory_space<vmem>>, vector<256x128xf32>
    %cst_16 = arith.constant dense<0.000000e+00> : vector<32x128xf32>
    %23 = tpu.matmul %21, %22, %cst_16 {dimension_numbers = #tpu.dot_dimension_numbers<[1], [0], [0], [1], [0, 0, 1, 1], [], []>} : vector<32x256xf32>, vector<256x128xf32>, vector<32x128xf32> -> vector<32x128xf32>
    %24 = vector.extract_strided_slice %23 {offsets = [0, 0], sizes = [32, 1], strides = [1, 1]} : vector<32x128xf32> to vector<32x1xf32>
    %25 = tpu.reciprocal %24 : vector<32x1xf32> -> vector<32x1xf32>
    %26 = vector.broadcast %25 : vector<32x1xf32> to vector<32x256xf32>
    %27 = arith.mulf %21, %26 : vector<32x256xf32>
    %28 = vector.broadcast %25 : vector<32x1xf32> to vector<32x128xf32>
    %29 = arith.mulf %23, %28 : vector<32x128xf32>
    %30 = vector.extract_strided_slice %27 {offsets = [0, 0], sizes = [16, 256], strides = [1, 1]} : vector<32x256xf32> to vector<16x256xf32>
    %c0_17 = arith.constant 0 : index
    %c0_18 = arith.constant 0 : index
    %31 = vector.load %arg9[%c0_17, %c0_18] : memref<16x256xf32, #tpu.memory_space<vmem>>, vector<16x256xf32>
    tpu.vector_store %arg9[%c0_17, %c0_18], %30 {strides = array<i32>} : memref<16x256xf32, #tpu.memory_space<vmem>>, vector<16x256xf32>,
    %32 = vector.extract_strided_slice %27 {offsets = [16, 0], sizes = [16, 256], strides = [1, 1]} : vector<32x256xf32> to vector<16x256xf32>
    %c0_19 = arith.constant 0 : index
    %c0_20 = arith.constant 0 : index
    %33 = vector.load %arg11[%c0_19, %c0_20] : memref<16x256xf32, #tpu.memory_space<vmem>>, vector<16x256xf32>
    tpu.vector_store %arg11[%c0_19, %c0_20], %32 {strides = array<i32>} : memref<16x256xf32, #tpu.memory_space<vmem>>, vector<16x256xf32>,
    %34 = vector.extract_strided_slice %29 {offsets = [0, 0], sizes = [16, 128], strides = [1, 1]} : vector<32x128xf32> to vector<16x128xf32>
    %c0_21 = arith.constant 0 : index
    %c0_22 = arith.constant 0 : index
    %35 = vector.load %arg8[%c0_21, %c0_22] : memref<16x128xf32, #tpu.memory_space<vmem>>, vector<16x128xf32>
    tpu.vector_store %arg8[%c0_21, %c0_22], %34 {strides = array<i32>} : memref<16x128xf32, #tpu.memory_space<vmem>>, vector<16x128xf32>,
    %36 = vector.extract_strided_slice %29 {offsets = [16, 0], sizes = [16, 128], strides = [1, 1]} : vector<32x128xf32> to vector<16x128xf32>
    %c0_23 = arith.constant 0 : index
    %c0_24 = arith.constant 0 : index
    %37 = vector.load %arg10[%c0_23, %c0_24] : memref<16x128xf32, #tpu.memory_space<vmem>>, vector<16x128xf32>
    tpu.vector_store %arg10[%c0_23, %c0_24], %36 {strides = array<i32>} : memref<16x128xf32, #tpu.memory_space<vmem>>, vector<16x128xf32>,
    return
  }
  func.func @transform_0(%arg0: i32) -> (i32, i32) {
    %c0_i32 = arith.constant 0 : i32
    %c0_i32_0 = arith.constant 0 : i32
    return %arg0, %c0_i32 : i32, i32
  }
  func.func @transform_1(%arg0: i32) -> (i32, i32) {
    %c0_i32 = arith.constant 0 : i32
    %c0_i32_0 = arith.constant 0 : i32
    %c0_i32_1 = arith.constant 0 : i32
    return %c0_i32, %c0_i32_0 : i32, i32
  }
  func.func @transform_2(%arg0: i32) -> (i32, i32) {
    %c0_i32 = arith.constant 0 : i32
    %c0_i32_0 = arith.constant 0 : i32
    %c0_i32_1 = arith.constant 0 : i32
    return %c0_i32, %c0_i32_0 : i32, i32
  }
  func.func @transform_3(%arg0: i32) -> (i32, i32) {
    %c0_i32 = arith.constant 0 : i32
    %c0_i32_0 = arith.constant 0 : i32
    %c0_i32_1 = arith.constant 0 : i32
    return %c0_i32, %c0_i32_0 : i32, i32
  }
  func.func @transform_4(%arg0: i32) -> (i32, i32) {
    %c0_i32 = arith.constant 0 : i32
    %c0_i32_0 = arith.constant 0 : i32
    %c0_i32_1 = arith.constant 0 : i32
    return %c0_i32, %c0_i32_0 : i32, i32
  }
  func.func @transform_5(%arg0: i32) -> (i32, i32) {
    %c0_i32 = arith.constant 0 : i32
    %c0_i32_0 = arith.constant 0 : i32
    %c0_i32_1 = arith.constant 0 : i32
    return %c0_i32, %c0_i32_0 : i32, i32
  }
  func.func @transform_6(%arg0: i32) -> (i32, i32) {
    %c0_i32 = arith.constant 0 : i32
    %c0_i32_0 = arith.constant 0 : i32
    %c0_i32_1 = arith.constant 0 : i32
    return %c0_i32, %c0_i32_0 : i32, i32
  }
  func.func @transform_7(%arg0: i32) -> (i32, i32) {
    %c0_i32 = arith.constant 0 : i32
    %c0_i32_0 = arith.constant 0 : i32
    return %arg0, %c0_i32 : i32, i32
  }
  func.func @transform_8(%arg0: i32) -> (i32, i32) {
    %c0_i32 = arith.constant 0 : i32
    %c0_i32_0 = arith.constant 0 : i32
    return %arg0, %c0_i32 : i32, i32
  }
  func.func @transform_9(%arg0: i32) -> (i32, i32) {
    %c0_i32 = arith.constant 0 : i32
    %c0_i32_0 = arith.constant 0 : i32
    return %arg0, %c0_i32 : i32, i32
  }
  func.func @transform_10(%arg0: i32) -> (i32, i32) {
    %c0_i32 = arith.constant 0 : i32
    %c0_i32_0 = arith.constant 0 : i32
    return %arg0, %c0_i32 : i32, i32
  }
}

</mosaic_0001>

<llo_original>
// kernel: network_forward.1
$region0: #{network_forward.1}
  #allocation0 [shape = 'u32[]', space=smem, size = 0x4, offset = 0x4, fixed_abs, tag = 'smem constant byte address 0x4 - core index']
  #allocation1 [shape = 'u32[144,128]{1,0:T(1,128)}', space=vmem, size = 0x12000, scoped, tag = 'internal scratch']
  %s0 = inlined_call_operand.vmem [shape: f32[48,128], index: 0, kind: input, shape index: {}]
  %s1 = inlined_call_operand.vmem [shape: f32[128,128], index: 1, kind: input, shape index: {}]
  %s2 = inlined_call_operand.vmem [shape: f32[1,128], index: 2, kind: input, shape index: {}]
  %s3 = inlined_call_operand.vmem [shape: f32[128,256], index: 3, kind: input, shape index: {}]
  %s4 = inlined_call_operand.vmem [shape: f32[1,256], index: 4, kind: input, shape index: {}]
  %s5 = inlined_call_operand.vmem [shape: f32[128,256], index: 5, kind: input, shape index: {}]
  %s6 = inlined_call_operand.vmem [shape: f32[256,128], index: 6, kind: input, shape index: {}]
  %s7 = inlined_call_operand.vmem [shape: f32[48,128], index: 7, kind: output, shape index: {0}]
  %s8 = inlined_call_operand.vmem [shape: f32[48,256], index: 8, kind: output, shape index: {1}]
  %s9 = inlined_call_operand.vmem [shape: f32[48,128], index: 9, kind: output, shape index: {2}]
  %s10 = inlined_call_operand.vmem [shape: f32[48,256], index: 10, kind: output, shape index: {3}]
  %11 = xla_tuple %s7, %s8, %s9, %s10
  %s12 = sld [smem:[#allocation0]]
  $region85: #{network_forward.1} parent=0
    _
  %s14 = ssub.s32 1, %s12
  %s15 = scalar_select 0, %s14, %s12
  loop: start=0, step=1, limit=5
  $region2: #{network_forward.1} parent=0 // loop_pre_header
    _
  $region3: #{network_forward.1} parent=0 // loop_header
    %s17 = sphi 0, %s21
    %p18 = scmp.ge.s32.totalorder %s17, 5
    %s27 = sphi 0, %s29
    %s30 = sphi 0, %s27
    %s31 = sphi 0, %s30
    %s47 = sphi 0, %s31
    %s51 = sphi 0, %s51
    %s53 = sphi 0, %s51
    %s54 = sphi 0, %s53
    %s68 = sphi 0, %s54
    %s72 = sphi 0, %s72
    %s74 = sphi 0, %s72
    %s75 = sphi 0, %s74
    %s89 = sphi 0, %s75
    %s93 = sphi 0, %s93
    %s95 = sphi 0, %s93
    %s96 = sphi 0, %s95
    %s110 = sphi 0, %s96
    %s114 = sphi 0, %s114
    %s116 = sphi 0, %s114
    %s117 = sphi 0, %s116
    %s131 = sphi 0, %s117
    %s135 = sphi 0, %s135
    %s137 = sphi 0, %s135
    %s138 = sphi 0, %s137
    %s152 = sphi 0, %s138
    %s156 = sphi 0, %s156
    %s158 = sphi 0, %s156
    %s159 = sphi 0, %s158
    %s173 = sphi 0, %s159
    %s179 = sphi 0, %s181
    %s182 = sphi 0, %s179
    %s183 = sphi 0, %s182
    %s199 = sphi 0, %s183
    %s205 = sphi 0, %s207
    %s208 = sphi 0, %s205
    %s209 = sphi 0, %s208
    %s225 = sphi 0, %s209
    %s231 = sphi 0, %s233
    %s234 = sphi 0, %s231
    %s235 = sphi 0, %s234
    %s251 = sphi 0, %s235
    %s257 = sphi 0, %s259
    %s260 = sphi 0, %s257
    %s261 = sphi 0, %s260
    %s277 = sphi 0, %s261
  $region4: #{network_forward.1} parent=0 // loop_header_branch
    %20 = sbr.rel (%p18) target = $region8
  $region5: #{network_forward.1} parent=0 // loop_body
    %s22 = ssub.s32 %s17, 1
    %s23 = ssub.s32 %s17, 2
    %s24 = sadd.s32 %s17, 1
    %s25 = ssub.s32 %s17, %s24
    %p26 = scmp.eq.s32.totalorder %s25, 0
    %s28 = sadd.s32 %s27, 1
    %s29 = scalar_select %p26, %s27, %s28
    %p32 = pneg %p26
    %p33 = scmp.eq.s32.totalorder %s17, 2
    %p34 = por %p32, %p33
    %p35 = scmp.ne.s32.totalorder %s27, %s30
    %p36 = scmp.eq.s32.totalorder %s17, 0
    %p37 = por %p35, %p36
    %p38 = scmp.ne.s32.totalorder %s27, %s30
    %p39 = scmp.eq.s32.totalorder %s22, 2
    %p40 = por %p38, %p39
    %p41 = scmp.ne.s32.totalorder %s30, %s31
    %p42 = scmp.eq.s32.totalorder %s22, 0
    %p43 = por %p41, %p42
    %p44 = scmp.ne.s32.totalorder %s30, %s31
    %p45 = scmp.eq.s32.totalorder %s23, 2
    %p46 = por %p44, %p45
    %p48 = scmp.ne.s32.totalorder %s31, %s47
    %p49 = scmp.eq.s32.totalorder %s23, 0
    %p50 = por %p48, %p49
    %s52 = sadd.s32 %s51, 1
    %p55 = scmp.eq.s32.totalorder %s17, 2
    %p56 = scmp.ne.s32.totalorder %s51, %s53
    %p57 = scmp.eq.s32.totalorder %s17, 0
    %p58 = por %p56, %p57
    %p59 = scmp.ne.s32.totalorder %s51, %s53
    %p60 = scmp.eq.s32.totalorder %s22, 2
    %p61 = por %p59, %p60
    %p62 = scmp.ne.s32.totalorder %s53, %s54
    %p63 = scmp.eq.s32.totalorder %s22, 0
    %p64 = por %p62, %p63
    %p65 = scmp.ne.s32.totalorder %s53, %s54
    %p66 = scmp.eq.s32.totalorder %s23, 2
    %p67 = por %p65, %p66
    %p69 = scmp.ne.s32.totalorder %s54, %s68
    %p70 = scmp.eq.s32.totalorder %s23, 0
    %p71 = por %p69, %p70
    %s73 = sadd.s32 %s72, 1
    %p76 = scmp.eq.s32.totalorder %s17, 2
    %p77 = scmp.ne.s32.totalorder %s72, %s74
    %p78 = scmp.eq.s32.totalorder %s17, 0
    %p79 = por %p77, %p78
    %p80 = scmp.ne.s32.totalorder %s72, %s74
    %p81 = scmp.eq.s32.totalorder %s22, 2
    %p82 = por %p80, %p81
    %p83 = scmp.ne.s32.totalorder %s74, %s75
    %p84 = scmp.eq.s32.totalorder %s22, 0
    %p85 = por %p83, %p84
    %p86 = scmp.ne.s32.totalorder %s74, %s75
    %p87 = scmp.eq.s32.totalorder %s23, 2
    %p88 = por %p86, %p87
    %p90 = scmp.ne.s32.totalorder %s75, %s89
    %p91 = scmp.eq.s32.totalorder %s23, 0
    %p92 = por %p90, %p91
    %s94 = sadd.s32 %s93, 1
    %p97 = scmp.eq.s32.totalorder %s17, 2
    %p98 = scmp.ne.s32.totalorder %s93, %s95
    %p99 = scmp.eq.s32.totalorder %s17, 0
    %p100 = por %p98, %p99
    %p101 = scmp.ne.s32.totalorder %s93, %s95
    %p102 = scmp.eq.s32.totalorder %s22, 2
    %p103 = por %p101, %p102
    %p104 = scmp.ne.s32.totalorder %s95, %s96
    %p105 = scmp.eq.s32.totalorder %s22, 0
    %p106 = por %p104, %p105
    %p107 = scmp.ne.s32.totalorder %s95, %s96
    %p108 = scmp.eq.s32.totalorder %s23, 2
    %p109 = por %p107, %p108
    %p111 = scmp.ne.s32.totalorder %s96, %s110
    %p112 = scmp.eq.s32.totalorder %s23, 0
    %p113 = por %p111, %p112
    %s115 = sadd.s32 %s114, 1
    %p118 = scmp.eq.s32.totalorder %s17, 2
    %p119 = scmp.ne.s32.totalorder %s114, %s116
    %p120 = scmp.eq.s32.totalorder %s17, 0
    %p121 = por %p119, %p120
    %p122 = scmp.ne.s32.totalorder %s114, %s116
    %p123 = scmp.eq.s32.totalorder %s22, 2
    %p124 = por %p122, %p123
    %p125 = scmp.ne.s32.totalorder %s116, %s117
    %p126 = scmp.eq.s32.totalorder %s22, 0
    %p127 = por %p125, %p126
    %p128 = scmp.ne.s32.totalorder %s116, %s117
    %p129 = scmp.eq.s32.totalorder %s23, 2
    %p130 = por %p128, %p129
    %p132 = scmp.ne.s32.totalorder %s117, %s131
    %p133 = scmp.eq.s32.totalorder %s23, 0
    %p134 = por %p132, %p133
    %s136 = sadd.s32 %s135, 1
    %p139 = scmp.eq.s32.totalorder %s17, 2
    %p140 = scmp.ne.s32.totalorder %s135, %s137
    %p141 = scmp.eq.s32.totalorder %s17, 0
    %p142 = por %p140, %p141
    %p143 = scmp.ne.s32.totalorder %s135, %s137
    %p144 = scmp.eq.s32.totalorder %s22, 2
    %p145 = por %p143, %p144
    %p146 = scmp.ne.s32.totalorder %s137, %s138
    %p147 = scmp.eq.s32.totalorder %s22, 0
    %p148 = por %p146, %p147
    %p149 = scmp.ne.s32.totalorder %s137, %s138
    %p150 = scmp.eq.s32.totalorder %s23, 2
    %p151 = por %p149, %p150
    %p153 = scmp.ne.s32.totalorder %s138, %s152
    %p154 = scmp.eq.s32.totalorder %s23, 0
    %p155 = por %p153, %p154
    %s157 = sadd.s32 %s156, 1
    %p160 = scmp.eq.s32.totalorder %s17, 2
    %p161 = scmp.ne.s32.totalorder %s156, %s158
    %p162 = scmp.eq.s32.totalorder %s17, 0
    %p163 = por %p161, %p162
    %p164 = scmp.ne.s32.totalorder %s156, %s158
    %p165 = scmp.eq.s32.totalorder %s22, 2
    %p166 = por %p164, %p165
    %p167 = scmp.ne.s32.totalorder %s158, %s159
    %p168 = scmp.eq.s32.totalorder %s22, 0
    %p169 = por %p167, %p168
    %p170 = scmp.ne.s32.totalorder %s158, %s159
    %p171 = scmp.eq.s32.totalorder %s23, 2
    %p172 = por %p170, %p171
    %p174 = scmp.ne.s32.totalorder %s159, %s173
    %p175 = scmp.eq.s32.totalorder %s23, 0
    %p176 = por %p174, %p175
    %s177 = ssub.s32 %s17, %s24
    %p178 = scmp.eq.s32.totalorder %s177, 0
    %s180 = sadd.s32 %s179, 1
    %s181 = scalar_select %p178, %s179, %s180
    %p184 = pneg %p178
    %p185 = scmp.eq.s32.totalorder %s17, 2
    %p186 = por %p184, %p185
    %p187 = scmp.ne.s32.totalorder %s179, %s182
    %p188 = scmp.eq.s32.totalorder %s17, 0
    %p189 = por %p187, %p188
    %p190 = scmp.ne.s32.totalorder %s179, %s182
    %p191 = scmp.eq.s32.totalorder %s22, 2
    %p192 = por %p190, %p191
    %p193 = scmp.ne.s32.totalorder %s182, %s183
    %p194 = scmp.eq.s32.totalorder %s22, 0
    %p195 = por %p193, %p194
    %p196 = scmp.ne.s32.totalorder %s182, %s183
    %p197 = scmp.eq.s32.totalorder %s23, 2
    %p198 = por %p196, %p197
    %p200 = scmp.ne.s32.totalorder %s183, %s199
    %p201 = scmp.eq.s32.totalorder %s23, 0
    %p202 = por %p200, %p201
    %s203 = ssub.s32 %s17, %s24
    %p204 = scmp.eq.s32.totalorder %s203, 0
    %s206 = sadd.s32 %s205, 1
    %s207 = scalar_select %p204, %s205, %s206
    %p210 = pneg %p204
    %p211 = scmp.eq.s32.totalorder %s17, 2
    %p212 = por %p210, %p211
    %p213 = scmp.ne.s32.totalorder %s205, %s208
    %p214 = scmp.eq.s32.totalorder %s17, 0
    %p215 = por %p213, %p214
    %p216 = scmp.ne.s32.totalorder %s205, %s208
    %p217 = scmp.eq.s32.totalorder %s22, 2
    %p218 = por %p216, %p217
    %p219 = scmp.ne.s32.totalorder %s208, %s209
    %p220 = scmp.eq.s32.totalorder %s22, 0
    %p221 = por %p219, %p220
    %p222 = scmp.ne.s32.totalorder %s208, %s209
    %p223 = scmp.eq.s32.totalorder %s23, 2
    %p224 = por %p222, %p223
    %p226 = scmp.ne.s32.totalorder %s209, %s225
    %p227 = scmp.eq.s32.totalorder %s23, 0
    %p228 = por %p226, %p227
    %s229 = ssub.s32 %s17, %s24
    %p230 = scmp.eq.s32.totalorder %s229, 0
    %s232 = sadd.s32 %s231, 1
    %s233 = scalar_select %p230, %s231, %s232
    %p236 = pneg %p230
    %p237 = scmp.eq.s32.totalorder %s17, 2
    %p238 = por %p236, %p237
    %p239 = scmp.ne.s32.totalorder %s231, %s234
    %p240 = scmp.eq.s32.totalorder %s17, 0
    %p241 = por %p239, %p240
    %p242 = scmp.ne.s32.totalorder %s231, %s234
    %p243 = scmp.eq.s32.totalorder %s22, 2
    %p244 = por %p242, %p243
    %p245 = scmp.ne.s32.totalorder %s234, %s235
    %p246 = scmp.eq.s32.totalorder %s22, 0
    %p247 = por %p245, %p246
    %p248 = scmp.ne.s32.totalorder %s234, %s235
    %p249 = scmp.eq.s32.totalorder %s23, 2
    %p250 = por %p248, %p249
    %p252 = scmp.ne.s32.totalorder %s235, %s251
    %p253 = scmp.eq.s32.totalorder %s23, 0
    %p254 = por %p252, %p253
    %s255 = ssub.s32 %s17, %s24
    %p256 = scmp.eq.s32.totalorder %s255, 0
    %s258 = sadd.s32 %s257, 1
    %s259 = scalar_select %p256, %s257, %s258
    %p262 = pneg %p256
    %p263 = scmp.eq.s32.totalorder %s17, 2
    %p264 = por %p262, %p263
    %p265 = scmp.ne.s32.totalorder %s257, %s260
    %p266 = scmp.eq.s32.totalorder %s17, 0
    %p267 = por %p265, %p266
    %p268 = scmp.ne.s32.totalorder %s257, %s260
    %p269 = scmp.eq.s32.totalorder %s22, 2
    %p270 = por %p268, %p269
    %p271 = scmp.ne.s32.totalorder %s260, %s261
    %p272 = scmp.eq.s32.totalorder %s22, 0
    %p273 = por %p271, %p272
    %p274 = scmp.ne.s32.totalorder %s260, %s261
    %p275 = scmp.eq.s32.totalorder %s23, 2
    %p276 = por %p274, %p275
    %p278 = scmp.ne.s32.totalorder %s261, %s277
    %p279 = scmp.eq.s32.totalorder %s23, 0
    %p280 = por %p278, %p279
    %p281 = scmp.le.s32.totalorder 1, %s17
    %p282 = scmp.lt.s32.totalorder %s17, 4
    %p283 = pnand %p281, %p282
    %p284 = pneg %p283
    // Predicated region
    $region9: #{network_forward.1} parent=5 // pred_check
      _
    $region10: #{network_forward.1} parent=5 // pred_check_branch
      %286 = sbr.rel (%p283) target = $region12
    $region11: #{network_forward.1} parent=5 // pred_region
      %s287 = ssub.s32 %s17, 1
      // Predicated region
      $region13: #{network_forward.1} parent=11 // pred_check
        %p288 = pneg %p64
      $region14: #{network_forward.1} parent=11 // pred_check_branch
        %290 = sbr.rel (%p288) target = $region16
      $region15: #{network_forward.1} parent=11 // pred_region
        _
      $region16: #{network_forward.1} parent=11 // pred_fallthru
        _
      // Predicated region
      $region17: #{network_forward.1} parent=11 // pred_check
        %p291 = pneg %p85
      $region18: #{network_forward.1} parent=11 // pred_check_branch
        %293 = sbr.rel (%p291) target = $region20
      $region19: #{network_forward.1} parent=11 // pred_region
        _
      $region20: #{network_forward.1} parent=11 // pred_fallthru
        _
      // Predicated region
      $region21: #{network_forward.1} parent=11 // pred_check
        %p294 = pneg %p106
      $region22: #{network_forward.1} parent=11 // pred_check_branch
        %296 = sbr.rel (%p294) target = $region24
      $region23: #{network_forward.1} parent=11 // pred_region
        _
      $region24: #{network_forward.1} parent=11 // pred_fallthru
        _
      // Predicated region
      $region25: #{network_forward.1} parent=11 // pred_check
        %p297 = pneg %p127
      $region26: #{network_forward.1} parent=11 // pred_check_branch
        %299 = sbr.rel (%p297) target = $region28
      $region27: #{network_forward.1} parent=11 // pred_region
        _
      $region28: #{network_forward.1} parent=11 // pred_fallthru
        _
      // Predicated region
      $region29: #{network_forward.1} parent=11 // pred_check
        %p300 = pneg %p148
      $region30: #{network_forward.1} parent=11 // pred_check_branch
        %302 = sbr.rel (%p300) target = $region32
      $region31: #{network_forward.1} parent=11 // pred_region
        _
      $region32: #{network_forward.1} parent=11 // pred_fallthru
        _
      // Predicated region
      $region33: #{network_forward.1} parent=11 // pred_check
        %p303 = pneg %p169
      $region34: #{network_forward.1} parent=11 // pred_check_branch
        %305 = sbr.rel (%p303) target = $region36
      $region35: #{network_forward.1} parent=11 // pred_region
        _
      $region36: #{network_forward.1} parent=11 // pred_fallthru
        _
    $region12: #{network_forward.1} parent=5 // pred_fallthru
      _
    %p306 = scmp.lt.s32.totalorder %s17, 3
    // Predicated region
    $region37: #{network_forward.1} parent=5 // pred_check
      %p307 = pneg %p306
    $region38: #{network_forward.1} parent=5 // pred_check_branch
      %309 = sbr.rel (%p307) target = $region40
    $region39: #{network_forward.1} parent=5 // pred_region
      // Predicated region
      $region41: #{network_forward.1} parent=39 // pred_check
        %p310 = pneg %p37
      $region42: #{network_forward.1} parent=39 // pred_check_branch
        %312 = sbr.rel (%p310) target = $region44
      $region43: #{network_forward.1} parent=39 // pred_region
        %s313 = smul.u32 2, %s17
        %p314 = scmp.lt.s32.totalorder %s313, 5
        %s315 = scalar_select %p314, %s313, 5
        %s316 = smul.addr %s315, 8
        %s317 = scalar_lea.vmem %s0, %s316
        %s318 = smul.u32 2, %s17
      $region44: #{network_forward.1} parent=39 // pred_fallthru
        _
    $region40: #{network_forward.1} parent=5 // pred_fallthru
      _
    %p319 = scmp.le.s32.totalorder 1, %s17
    %p320 = scmp.lt.s32.totalorder %s17, 4
    %p321 = pnand %p319, %p320
    %p322 = pneg %p321
    // Predicated region
    $region45: #{network_forward.1} parent=5 // pred_check
      _
    $region46: #{network_forward.1} parent=5 // pred_check_branch
      %324 = sbr.rel (%p321) target = $region48
    $region47: #{network_forward.1} parent=5 // pred_region
      %s325 = ssub.s32 %s17, 1
      %s326 = smul.u32 2, %s22
      %p327 = scmp.lt.s32.totalorder %s326, 5
      %s328 = scalar_select %p327, %s326, 5
      %s329 = smul.addr %s328, 8
      %s330 = scalar_lea.vmem %s0, %s329
      %p331 = pneg %p43
      %p332 = pneg %p40
      %p333 = pneg %p64
      %p334 = pneg %p61
      %p335 = pneg %p85
      %p336 = pneg %p82
      %p337 = pneg %p106
      %p338 = pneg %p103
      %p339 = pneg %p127
      %p340 = pneg %p124
      %p341 = pneg %p148
      %p342 = pneg %p145
      %p343 = pneg %p169
      %p344 = pneg %p166
      %p345 = pneg %p195
      %p346 = pneg %p192
      %s347 = smul.u32 2, %s22
      %p348 = scmp.lt.s32.totalorder %s347, 5
      %s349 = scalar_select %p348, %s347, 5
      %s350 = smul.addr %s349, 8
      %s351 = scalar_lea.vmem %s7, %s350
      %p352 = pneg %p221
      %p353 = pneg %p218
      %s354 = smul.u32 2, %s22
      %p355 = scmp.lt.s32.totalorder %s354, 5
      %s356 = scalar_select %p355, %s354, 5
      %s357 = smul.addr %s356, 2
      %s358 = smul.addr %s357, 8
      %s359 = scalar_lea.vmem %s8, %s358
      %p360 = pneg %p247
      %p361 = pneg %p244
      %s362 = smul.u32 2, %s22
      %p363 = scmp.lt.s32.totalorder %s362, 5
      %s364 = scalar_select %p363, %s362, 5
      %s365 = smul.addr %s364, 8
      %s366 = scalar_lea.vmem %s9, %s365
      %p367 = pneg %p273
      %p368 = pneg %p270
      %s369 = smul.u32 2, %s22
      %p370 = scmp.lt.s32.totalorder %s369, 5
      %s371 = scalar_select %p370, %s369, 5
      %s372 = smul.addr %s371, 2
      %s373 = smul.addr %s372, 8
      %s374 = scalar_lea.vmem %s10, %s373
      %s375 = smul.u32 2, %s22
      %p376 = scmp.lt.s32.totalorder %s375, 5
      %s377 = scalar_select %p376, %s375, 5
      %s378 = smul.addr %s377, 8
      %s379 = scalar_lea.vmem %s0, %s378
      %s380 = smul.u32 2, %s22
      %s381 = smul.u32 2, %s22
      %p382 = scmp.lt.s32.totalorder %s381, 5
      %s383 = scalar_select %p382, %s381, 5
      %s384 = smul.addr %s383, 8
      %s385 = scalar_lea.vmem %s7, %s384
      %s386 = smul.u32 2, %s22
      %s387 = smul.u32 2, %s22
      %p388 = scmp.lt.s32.totalorder %s387, 5
      %s389 = scalar_select %p388, %s387, 5
      %s390 = smul.addr %s389, 2
      %s391 = smul.addr %s390, 8
      %s392 = scalar_lea.vmem %s8, %s391
      %s393 = smul.u32 2, %s22
      %s394 = smul.u32 2, %s22
      %p395 = scmp.lt.s32.totalorder %s394, 5
      %s396 = scalar_select %p395, %s394, 5
      %s397 = smul.addr %s396, 8
      %s398 = scalar_lea.vmem %s9, %s397
      %s399 = smul.u32 2, %s22
      %s400 = smul.u32 2, %s22
      %p401 = scmp.lt.s32.totalorder %s400, 5
      %s402 = scalar_select %p401, %s400, 5
      %s403 = smul.addr %s402, 2
      %s404 = smul.addr %s403, 8
      %s405 = scalar_lea.vmem %s10, %s404
      %s406 = smul.u32 2, %s22
      %v407 = vld [vmem:[%s379] sm:$0xff]
      %v408 = vld [vmem:[%s379 + $0x8] sm:$0xff]
      %v409 = vld [vmem:[%s1] sm:$0xff]
      %v410 = vld [vmem:[%s1 + $0x8] sm:$0xff]
      %v411 = vld [vmem:[%s1 + $0x10] sm:$0xff]
      %v412 = vld [vmem:[%s1 + $0x18] sm:$0xff]
      %v413 = vld [vmem:[%s1 + $0x20] sm:$0xff]
      %v414 = vld [vmem:[%s1 + $0x28] sm:$0xff]
      %v415 = vld [vmem:[%s1 + $0x30] sm:$0xff]
      %v416 = vld [vmem:[%s1 + $0x38] sm:$0xff]
      %v417 = vld [vmem:[%s1 + $0x40] sm:$0xff]
      %v418 = vld [vmem:[%s1 + $0x48] sm:$0xff]
      %v419 = vld [vmem:[%s1 + $0x50] sm:$0xff]
      %v420 = vld [vmem:[%s1 + $0x58] sm:$0xff]
      %v421 = vld [vmem:[%s1 + $0x60] sm:$0xff]
      %v422 = vld [vmem:[%s1 + $0x68] sm:$0xff]
      %v423 = vld [vmem:[%s1 + $0x70] sm:$0xff]
      %v424 = vld [vmem:[%s1 + $0x78] sm:$0xff]
      %v425 = vld [vmem:[%s2] sm:$0x1]
      %v427 = vlaneseq
      %v428 = vshrl.u32 %v427, 7
      %v429 = vsub.s32 0, %v428
      %v430 = vrot.slane %v425, %v429
      %432 = vmatprep.subr.mxu0 0.0
      %433 = vmatpush1.msra.mxu0 %v409
      %434 = vmatprep.subr.mxu0 0.0
      %435 = vmatpush1.msra.mxu0 %v410
      %436 = vmatprep.subr.mxu0 0.0
      %437 = vmatpush1.msra.mxu0 %v411
      %438 = vmatprep.subr.mxu0 0.0
      %439 = vmatpush1.msra.mxu0 %v412
      %440 = vmatprep.subr.mxu0 0.0
      %441 = vmatpush1.msra.mxu0 %v413
      %442 = vmatprep.subr.mxu0 0.0
      %443 = vmatpush1.msra.mxu0 %v414
      %444 = vmatprep.subr.mxu0 0.0
      %445 = vmatpush1.msra.mxu0 %v415
      %446 = vmatprep.subr.mxu0 0.0
      %447 = vmatpush1.msra.mxu0 %v416
      %448 = vmatprep.subr.mxu0 0.0
      %449 = vmatpush1.msra.mxu0 %v417
      %450 = vmatprep.subr.mxu0 0.0
      %451 = vmatpush1.msra.mxu0 %v418
      %452 = vmatprep.subr.mxu0 0.0
      %453 = vmatpush1.msra.mxu0 %v419
      %454 = vmatprep.subr.mxu0 0.0
      %455 = vmatpush1.msra.mxu0 %v420
      %456 = vmatprep.subr.mxu0 0.0
      %457 = vmatpush1.msra.mxu0 %v421
      %458 = vmatprep.subr.mxu0 0.0
      %459 = vmatpush1.msra.mxu0 %v422
      %460 = vmatprep.subr.mxu0 0.0
      %461 = vmatpush1.msra.mxu0 %v423
      %462 = vmatprep.subr.mxu0 0.0
      %463 = vmatpush1.msra.mxu0 %v424
      %464 = vmatprep.subr.mxu0 0.0
      %465 = vmatpush1.msra.mxu0 0.0
      %466 = vmatprep.subr.mxu0 0.0
      %467 = vmatpush1.msra.mxu0 0.0
      %468 = vmatprep.subr.mxu0 0.0
      %469 = vmatpush1.msra.mxu0 0.0
      %470 = vmatprep.subr.mxu0 0.0
      %471 = vmatpush1.msra.mxu0 0.0
      %472 = vmatprep.subr.mxu0 0.0
      %473 = vmatpush1.msra.mxu0 0.0
      %474 = vmatprep.subr.mxu0 0.0
      %475 = vmatpush1.msra.mxu0 0.0
      %476 = vmatprep.subr.mxu0 0.0
      %477 = vmatpush1.msra.mxu0 0.0
      %478 = vmatprep.subr.mxu0 0.0
      %479 = vmatpush1.msra.mxu0 0.0
      %480 = vmatprep.subr.mxu0 0.0
      %481 = vmatpush1.msra.mxu0 0.0
      %482 = vmatprep.subr.mxu0 0.0
      %483 = vmatpush1.msra.mxu0 0.0
      %484 = vmatprep.subr.mxu0 0.0
      %485 = vmatpush1.msra.mxu0 0.0
      %486 = vmatprep.subr.mxu0 0.0
      %487 = vmatpush1.msra.mxu0 0.0
      %488 = vmatprep.subr.mxu0 0.0
      %489 = vmatpush1.msra.mxu0 0.0
      %490 = vmatprep.subr.mxu0 0.0
      %491 = vmatpush1.msra.mxu0 0.0
      %492 = vmatprep.subr.mxu0 0.0
      %493 = vmatpush1.msra.mxu0 0.0
      %494 = vmatprep.subr.mxu0 0.0
      %495 = vmatpush1.msra.mxu0 0.0
      %496 = vmatprep.mubr.f32.mxu0 0.0
      %497 = vmatmul.mubr.f32.gmra.mrb[0].mxu0 %v407
      %v498 = vpop.f32.mrb[0].mxu0
      %v499 = vadd.f32 %v430, %v498
      %v500 = vpop.f32.mrb[0].mxu0
      %501 = vmatprep.mubr.f32.mxu0 0.0
      %502 = vmatmul.mubr.f32.gmra.mrb[0].mxu0 %v408
      %v503 = vpop.f32.mrb[0].mxu0
      %v504 = vadd.f32 %v430, %v503
      %v505 = vpop.f32.mrb[0].mxu0
      %506 = vdwg.mxu0
      %v507 = vxor.u32 %v499, 2147483648
      %v508 = vxor.u32 %v504, 2147483648
      %v509 = vmul.f32 %v507, 1.442695
      %v510 = vpow.pop %v509
      %v511 = vmul.f32 %v508, 1.442695
      %v512 = vpow.pop %v511
      %v513 = vadd.f32 %v510, 1.0
      %v514 = vadd.f32 %v512, 1.0
      %v515 = vrcp.pop %v513
      %v516 = vmul.f32 1.0, %v515
      %v517 = vrcp.pop %v514
      %v518 = vmul.f32 1.0, %v517
      %v519 = vld [vmem:[%s3] sm:$0xff]
      %v520 = vld [vmem:[%s3 + $0x8] sm:$0xff]
      %v521 = vld [vmem:[%s3 + $0x10] sm:$0xff]
      %v522 = vld [vmem:[%s3 + $0x18] sm:$0xff]
      %v523 = vld [vmem:[%s3 + $0x20] sm:$0xff]
      %v524 = vld [vmem:[%s3 + $0x28] sm:$0xff]
      %v525 = vld [vmem:[%s3 + $0x30] sm:$0xff]
      %v526 = vld [vmem:[%s3 + $0x38] sm:$0xff]
      %v527 = vld [vmem:[%s3 + $0x40] sm:$0xff]
      %v528 = vld [vmem:[%s3 + $0x48] sm:$0xff]
      %v529 = vld [vmem:[%s3 + $0x50] sm:$0xff]
      %v530 = vld [vmem:[%s3 + $0x58] sm:$0xff]
      %v531 = vld [vmem:[%s3 + $0x60] sm:$0xff]
      %v532 = vld [vmem:[%s3 + $0x68] sm:$0xff]
      %v533 = vld [vmem:[%s3 + $0x70] sm:$0xff]
      %v534 = vld [vmem:[%s3 + $0x78] sm:$0xff]
      %v535 = vld [vmem:[%s3 + $0x80] sm:$0xff]
      %v536 = vld [vmem:[%s3 + $0x88] sm:$0xff]
      %v537 = vld [vmem:[%s3 + $0x90] sm:$0xff]
      %v538 = vld [vmem:[%s3 + $0x98] sm:$0xff]
      %v539 = vld [vmem:[%s3 + $0xa0] sm:$0xff]
      %v540 = vld [vmem:[%s3 + $0xa8] sm:$0xff]
      %v541 = vld [vmem:[%s3 + $0xb0] sm:$0xff]
      %v542 = vld [vmem:[%s3 + $0xb8] sm:$0xff]
      %v543 = vld [vmem:[%s3 + $0xc0] sm:$0xff]
      %v544 = vld [vmem:[%s3 + $0xc8] sm:$0xff]
      %v545 = vld [vmem:[%s3 + $0xd0] sm:$0xff]
      %v546 = vld [vmem:[%s3 + $0xd8] sm:$0xff]
      %v547 = vld [vmem:[%s3 + $0xe0] sm:$0xff]
      %v548 = vld [vmem:[%s3 + $0xe8] sm:$0xff]
      %v549 = vld [vmem:[%s3 + $0xf0] sm:$0xff]
      %v550 = vld [vmem:[%s3 + $0xf8] sm:$0xff]
      %v551 = vld [vmem:[%s4] sm:$0x3]
      %v553 = vlaneseq
      %v554 = vshrl.u32 %v553, 7
      %v555 = vsub.s32 0, %v554
      %v556 = vrot.slane %v551, %v555
      %v557 = vlaneseq
      %v558 = vshrl.u32 %v557, 7
      %v559 = vsub.s32 1, %v558
      %v560 = vrot.slane %v551, %v559
      %563 = vmatprep.subr.mxu0 %v520
      %564 = vmatpush1.msra.mxu0 %v519
      %565 = vmatprep.subr.mxu0 %v522
      %566 = vmatpush1.msra.mxu0 %v521
      %567 = vmatprep.subr.mxu0 %v524
      %568 = vmatpush1.msra.mxu0 %v523
      %569 = vmatprep.subr.mxu0 %v526
      %570 = vmatpush1.msra.mxu0 %v525
      %571 = vmatprep.subr.mxu0 %v528
      %572 = vmatpush1.msra.mxu0 %v527
      %573 = vmatprep.subr.mxu0 %v530
      %574 = vmatpush1.msra.mxu0 %v529
      %575 = vmatprep.subr.mxu0 %v532
      %576 = vmatpush1.msra.mxu0 %v531
      %577 = vmatprep.subr.mxu0 %v534
      %578 = vmatpush1.msra.mxu0 %v533
      %579 = vmatprep.subr.mxu0 %v536
      %580 = vmatpush1.msra.mxu0 %v535
      %581 = vmatprep.subr.mxu0 %v538
      %582 = vmatpush1.msra.mxu0 %v537
      %583 = vmatprep.subr.mxu0 %v540
      %584 = vmatpush1.msra.mxu0 %v539
      %585 = vmatprep.subr.mxu0 %v542
      %586 = vmatpush1.msra.mxu0 %v541
      %587 = vmatprep.subr.mxu0 %v544
      %588 = vmatpush1.msra.mxu0 %v543
      %589 = vmatprep.subr.mxu0 %v546
      %590 = vmatpush1.msra.mxu0 %v545
      %591 = vmatprep.subr.mxu0 %v548
      %592 = vmatpush1.msra.mxu0 %v547
      %593 = vmatprep.subr.mxu0 %v550
      %594 = vmatpush1.msra.mxu0 %v549
      %595 = vmatprep.subr.mxu0 0.0
      %596 = vmatpush1.msra.mxu0 0.0
      %597 = vmatprep.subr.mxu0 0.0
      %598 = vmatpush1.msra.mxu0 0.0
      %599 = vmatprep.subr.mxu0 0.0
      %600 = vmatpush1.msra.mxu0 0.0
      %601 = vmatprep.subr.mxu0 0.0
      %602 = vmatpush1.msra.mxu0 0.0
      %603 = vmatprep.subr.mxu0 0.0
      %604 = vmatpush1.msra.mxu0 0.0
      %605 = vmatprep.subr.mxu0 0.0
      %606 = vmatpush1.msra.mxu0 0.0
      %607 = vmatprep.subr.mxu0 0.0
      %608 = vmatpush1.msra.mxu0 0.0
      %609 = vmatprep.subr.mxu0 0.0
      %610 = vmatpush1.msra.mxu0 0.0
      %611 = vmatprep.subr.mxu0 0.0
      %612 = vmatpush1.msra.mxu0 0.0
      %613 = vmatprep.subr.mxu0 0.0
      %614 = vmatpush1.msra.mxu0 0.0
      %615 = vmatprep.subr.mxu0 0.0
      %616 = vmatpush1.msra.mxu0 0.0
      %617 = vmatprep.subr.mxu0 0.0
      %618 = vmatpush1.msra.mxu0 0.0
      %619 = vmatprep.subr.mxu0 0.0
      %620 = vmatpush1.msra.mxu0 0.0
      %621 = vmatprep.subr.mxu0 0.0
      %622 = vmatpush1.msra.mxu0 0.0
      %623 = vmatprep.subr.mxu0 0.0
      %624 = vmatpush1.msra.mxu0 0.0
      %625 = vmatprep.subr.mxu0 0.0
      %626 = vmatpush1.msra.mxu0 0.0
      %627 = vmatprep.mubr.f32.mxu0 0.0
      %628 = vmatmul.mubr.f32.gmra.mrb[0].mxu0 %v516
      %v629 = vpop.f32.mrb[0].mxu0
      %v630 = vadd.f32 %v556, %v629
      %v631 = vpop.f32.mrb[0].mxu0
      %v632 = vadd.f32 %v560, %v631
      %633 = vmatprep.mubr.f32.mxu0 0.0
      %634 = vmatmul.mubr.f32.gmra.mrb[0].mxu0 %v518
      %v635 = vpop.f32.mrb[0].mxu0
      %v636 = vadd.f32 %v556, %v635
      %v637 = vpop.f32.mrb[0].mxu0
      %v638 = vadd.f32 %v560, %v637
      %639 = vdwg.mxu0
      %v640 = vld [vmem:[%s5] sm:$0xff]
      %v641 = vld [vmem:[%s5 + $0x8] sm:$0xff]
      %v642 = vld [vmem:[%s5 + $0x10] sm:$0xff]
      %v643 = vld [vmem:[%s5 + $0x18] sm:$0xff]
      %v644 = vld [vmem:[%s5 + $0x20] sm:$0xff]
      %v645 = vld [vmem:[%s5 + $0x28] sm:$0xff]
      %v646 = vld [vmem:[%s5 + $0x30] sm:$0xff]
      %v647 = vld [vmem:[%s5 + $0x38] sm:$0xff]
      %v648 = vld [vmem:[%s5 + $0x40] sm:$0xff]
      %v649 = vld [vmem:[%s5 + $0x48] sm:$0xff]
      %v650 = vld [vmem:[%s5 + $0x50] sm:$0xff]
      %v651 = vld [vmem:[%s5 + $0x58] sm:$0xff]
      %v652 = vld [vmem:[%s5 + $0x60] sm:$0xff]
      %v653 = vld [vmem:[%s5 + $0x68] sm:$0xff]
      %v654 = vld [vmem:[%s5 + $0x70] sm:$0xff]
      %v655 = vld [vmem:[%s5 + $0x78] sm:$0xff]
      %v656 = vld [vmem:[%s5 + $0x80] sm:$0xff]
      %v657 = vld [vmem:[%s5 + $0x88] sm:$0xff]
      %v658 = vld [vmem:[%s5 + $0x90] sm:$0xff]
      %v659 = vld [vmem:[%s5 + $0x98] sm:$0xff]
      %v660 = vld [vmem:[%s5 + $0xa0] sm:$0xff]
      %v661 = vld [vmem:[%s5 + $0xa8] sm:$0xff]
      %v662 = vld [vmem:[%s5 + $0xb0] sm:$0xff]
      %v663 = vld [vmem:[%s5 + $0xb8] sm:$0xff]
      %v664 = vld [vmem:[%s5 + $0xc0] sm:$0xff]
      %v665 = vld [vmem:[%s5 + $0xc8] sm:$0xff]
      %v666 = vld [vmem:[%s5 + $0xd0] sm:$0xff]
      %v667 = vld [vmem:[%s5 + $0xd8] sm:$0xff]
      %v668 = vld [vmem:[%s5 + $0xe0] sm:$0xff]
      %v669 = vld [vmem:[%s5 + $0xe8] sm:$0xff]
      %v670 = vld [vmem:[%s5 + $0xf0] sm:$0xff]
      %v671 = vld [vmem:[%s5 + $0xf8] sm:$0xff]
      %672 = vmatprep.subr.mxu0 %v641
      %673 = vmatpush1.msra.mxu0 %v640
      %674 = vmatprep.subr.mxu0 %v643
      %675 = vmatpush1.msra.mxu0 %v642
      %676 = vmatprep.subr.mxu0 %v645
      %677 = vmatpush1.msra.mxu0 %v644
      %678 = vmatprep.subr.mxu0 %v647
      %679 = vmatpush1.msra.mxu0 %v646
      %680 = vmatprep.subr.mxu0 %v649
      %681 = vmatpush1.msra.mxu0 %v648
      %682 = vmatprep.subr.mxu0 %v651
      %683 = vmatpush1.msra.mxu0 %v650
      %684 = vmatprep.subr.mxu0 %v653
      %685 = vmatpush1.msra.mxu0 %v652
      %686 = vmatprep.subr.mxu0 %v655
      %687 = vmatpush1.msra.mxu0 %v654
      %688 = vmatprep.subr.mxu0 %v657
      %689 = vmatpush1.msra.mxu0 %v656
      %690 = vmatprep.subr.mxu0 %v659
      %691 = vmatpush1.msra.mxu0 %v658
      %692 = vmatprep.subr.mxu0 %v661
      %693 = vmatpush1.msra.mxu0 %v660
      %694 = vmatprep.subr.mxu0 %v663
      %695 = vmatpush1.msra.mxu0 %v662
      %696 = vmatprep.subr.mxu0 %v665
      %697 = vmatpush1.msra.mxu0 %v664
      %698 = vmatprep.subr.mxu0 %v667
      %699 = vmatpush1.msra.mxu0 %v666
      %700 = vmatprep.subr.mxu0 %v669
      %701 = vmatpush1.msra.mxu0 %v668
      %702 = vmatprep.subr.mxu0 %v671
      %703 = vmatpush1.msra.mxu0 %v670
      %704 = vmatprep.subr.mxu0 0.0
      %705 = vmatpush1.msra.mxu0 0.0
      %706 = vmatprep.subr.mxu0 0.0
      %707 = vmatpush1.msra.mxu0 0.0
      %708 = vmatprep.subr.mxu0 0.0
      %709 = vmatpush1.msra.mxu0 0.0
      %710 = vmatprep.subr.mxu0 0.0
      %711 = vmatpush1.msra.mxu0 0.0
      %712 = vmatprep.subr.mxu0 0.0
      %713 = vmatpush1.msra.mxu0 0.0
      %714 = vmatprep.subr.mxu0 0.0
      %715 = vmatpush1.msra.mxu0 0.0
      %716 = vmatprep.subr.mxu0 0.0
      %717 = vmatpush1.msra.mxu0 0.0
      %718 = vmatprep.subr.mxu0 0.0
      %719 = vmatpush1.msra.mxu0 0.0
      %720 = vmatprep.subr.mxu0 0.0
      %721 = vmatpush1.msra.mxu0 0.0
      %722 = vmatprep.subr.mxu0 0.0
      %723 = vmatpush1.msra.mxu0 0.0
      %724 = vmatprep.subr.mxu0 0.0
      %725 = vmatpush1.msra.mxu0 0.0
      %726 = vmatprep.subr.mxu0 0.0
      %727 = vmatpush1.msra.mxu0 0.0
      %728 = vmatprep.subr.mxu0 0.0
      %729 = vmatpush1.msra.mxu0 0.0
      %730 = vmatprep.subr.mxu0 0.0
      %731 = vmatpush1.msra.mxu0 0.0
      %732 = vmatprep.subr.mxu0 0.0
      %733 = vmatpush1.msra.mxu0 0.0
      %734 = vmatprep.subr.mxu0 0.0
      %735 = vmatpush1.msra.mxu0 0.0
      %736 = vmatprep.mubr.f32.mxu0 0.0
      %737 = vmatmul.mubr.f32.gmra.mrb[0].mxu0 %v630
      %v738 = vpop.f32.mrb[0].mxu0
      %v739 = vadd.f32 0.0, %v738
      %v740 = vpop.f32.mrb[0].mxu0
      %v741 = vadd.f32 0.0, %v740
      %742 = vmatprep.mubr.f32.mxu0 0.0
      %743 = vmatmul.mubr.f32.gmra.mrb[0].mxu0 %v636
      %v744 = vpop.f32.mrb[0].mxu0
      %v745 = vadd.f32 0.0, %v744
      %v746 = vpop.f32.mrb[0].mxu0
      %v747 = vadd.f32 0.0, %v746
      %748 = vmatprep.mubr.f32.mxu0 0.0
      %749 = vmatmul.mubr.f32.gmra.mrb[0].mxu0 %v632
      %v750 = vpop.f32.mrb[0].mxu0
      %v751 = vadd.f32 0.0, %v750
      %v752 = vpop.f32.mrb[0].mxu0
      %v753 = vadd.f32 0.0, %v752
      %754 = vmatprep.mubr.f32.mxu0 0.0
      %755 = vmatmul.mubr.f32.gmra.mrb[0].mxu0 %v638
      %v756 = vpop.f32.mrb[0].mxu0
      %v757 = vadd.f32 0.0, %v756
      %v758 = vpop.f32.mrb[0].mxu0
      %v759 = vadd.f32 0.0, %v758
      %760 = vdwg.mxu0
      %v761 = vmul.f32 %v739, 1.442695
      %v762 = vpow.pop %v761
      %v763 = vmul.f32 %v741, 1.442695
      %v764 = vpow.pop %v763
      %v765 = vmul.f32 %v745, 1.442695
      %v766 = vpow.pop %v765
      %v767 = vmul.f32 %v747, 1.442695
      %v768 = vpow.pop %v767
      %v769 = vmul.f32 %v751, 1.442695
      %v770 = vpow.pop %v769
      %v771 = vmul.f32 %v753, 1.442695
      %v772 = vpow.pop %v771
      %v773 = vmul.f32 %v757, 1.442695
      %v774 = vpow.pop %v773
      %v775 = vmul.f32 %v759, 1.442695
      %v776 = vpow.pop %v775
      %v777 = vld [vmem:[%s6] sm:$0xff]
      %v778 = vld [vmem:[%s6 + $0x8] sm:$0xff]
      %v779 = vld [vmem:[%s6 + $0x10] sm:$0xff]
      %v780 = vld [vmem:[%s6 + $0x18] sm:$0xff]
      %v781 = vld [vmem:[%s6 + $0x20] sm:$0xff]
      %v782 = vld [vmem:[%s6 + $0x28] sm:$0xff]
      %v783 = vld [vmem:[%s6 + $0x30] sm:$0xff]
      %v784 = vld [vmem:[%s6 + $0x38] sm:$0xff]
      %v785 = vld [vmem:[%s6 + $0x40] sm:$0xff]
      %v786 = vld [vmem:[%s6 + $0x48] sm:$0xff]
      %v787 = vld [vmem:[%s6 + $0x50] sm:$0xff]
      %v788 = vld [vmem:[%s6 + $0x58] sm:$0xff]
      %v789 = vld [vmem:[%s6 + $0x60] sm:$0xff]
      %v790 = vld [vmem:[%s6 + $0x68] sm:$0xff]
      %v791 = vld [vmem:[%s6 + $0x70] sm:$0xff]
      %v792 = vld [vmem:[%s6 + $0x78] sm:$0xff]
      %v793 = vld [vmem:[%s6 + $0x80] sm:$0xff]
      %v794 = vld [vmem:[%s6 + $0x88] sm:$0xff]
      %v795 = vld [vmem:[%s6 + $0x90] sm:$0xff]
      %v796 = vld [vmem:[%s6 + $0x98] sm:$0xff]
      %v797 = vld [vmem:[%s6 + $0xa0] sm:$0xff]
      %v798 = vld [vmem:[%s6 + $0xa8] sm:$0xff]
      %v799 = vld [vmem:[%s6 + $0xb0] sm:$0xff]
      %v800 = vld [vmem:[%s6 + $0xb8] sm:$0xff]
      %v801 = vld [vmem:[%s6 + $0xc0] sm:$0xff]
      %v802 = vld [vmem:[%s6 + $0xc8] sm:$0xff]
      %v803 = vld [vmem:[%s6 + $0xd0] sm:$0xff]
      %v804 = vld [vmem:[%s6 + $0xd8] sm:$0xff]
      %v805 = vld [vmem:[%s6 + $0xe0] sm:$0xff]
      %v806 = vld [vmem:[%s6 + $0xe8] sm:$0xff]
      %v807 = vld [vmem:[%s6 + $0xf0] sm:$0xff]
      %v808 = vld [vmem:[%s6 + $0xf8] sm:$0xff]
      %809 = vmatprep.subr.mxu0 0.0
      %810 = vmatpush1.msra.mxu0 %v777
      %811 = vmatprep.subr.mxu0 0.0
      %812 = vmatpush1.msra.mxu0 %v778
      %813 = vmatprep.subr.mxu0 0.0
      %814 = vmatpush1.msra.mxu0 %v779
      %815 = vmatprep.subr.mxu0 0.0
      %816 = vmatpush1.msra.mxu0 %v780
      %817 = vmatprep.subr.mxu0 0.0
      %818 = vmatpush1.msra.mxu0 %v781
      %819 = vmatprep.subr.mxu0 0.0
      %820 = vmatpush1.msra.mxu0 %v782
      %821 = vmatprep.subr.mxu0 0.0
      %822 = vmatpush1.msra.mxu0 %v783
      %823 = vmatprep.subr.mxu0 0.0
      %824 = vmatpush1.msra.mxu0 %v784
      %825 = vmatprep.subr.mxu0 0.0
      %826 = vmatpush1.msra.mxu0 %v785
      %827 = vmatprep.subr.mxu0 0.0
      %828 = vmatpush1.msra.mxu0 %v786
      %829 = vmatprep.subr.mxu0 0.0
      %830 = vmatpush1.msra.mxu0 %v787
      %831 = vmatprep.subr.mxu0 0.0
      %832 = vmatpush1.msra.mxu0 %v788
      %833 = vmatprep.subr.mxu0 0.0
      %834 = vmatpush1.msra.mxu0 %v789
      %835 = vmatprep.subr.mxu0 0.0
      %836 = vmatpush1.msra.mxu0 %v790
      %837 = vmatprep.subr.mxu0 0.0
      %838 = vmatpush1.msra.mxu0 %v791
      %839 = vmatprep.subr.mxu0 0.0
      %840 = vmatpush1.msra.mxu0 %v792
      %841 = vmatprep.subr.mxu0 0.0
      %842 = vmatpush1.msra.mxu0 %v793
      %843 = vmatprep.subr.mxu0 0.0
      %844 = vmatpush1.msra.mxu0 %v794
      %845 = vmatprep.subr.mxu0 0.0
      %846 = vmatpush1.msra.mxu0 %v795
      %847 = vmatprep.subr.mxu0 0.0
      %848 = vmatpush1.msra.mxu0 %v796
      %849 = vmatprep.subr.mxu0 0.0
      %850 = vmatpush1.msra.mxu0 %v797
      %851 = vmatprep.subr.mxu0 0.0
      %852 = vmatpush1.msra.mxu0 %v798
      %853 = vmatprep.subr.mxu0 0.0
      %854 = vmatpush1.msra.mxu0 %v799
      %855 = vmatprep.subr.mxu0 0.0
      %856 = vmatpush1.msra.mxu0 %v800
      %857 = vmatprep.subr.mxu0 0.0
      %858 = vmatpush1.msra.mxu0 %v801
      %859 = vmatprep.subr.mxu0 0.0
      %860 = vmatpush1.msra.mxu0 %v802
      %861 = vmatprep.subr.mxu0 0.0
      %862 = vmatpush1.msra.mxu0 %v803
      %863 = vmatprep.subr.mxu0 0.0
      %864 = vmatpush1.msra.mxu0 %v804
      %865 = vmatprep.subr.mxu0 0.0
      %866 = vmatpush1.msra.mxu0 %v805
      %867 = vmatprep.subr.mxu0 0.0
      %868 = vmatpush1.msra.mxu0 %v806
      %869 = vmatprep.subr.mxu0 0.0
      %870 = vmatpush1.msra.mxu0 %v807
      %871 = vmatprep.subr.mxu0 0.0
      %872 = vmatpush1.msra.mxu0 %v808
      %873 = vmatprep.mubr.f32.mxu0 %v764
      %874 = vmatmul.mubr.f32.gmra.mrb[0].mxu0 %v762
      %v875 = vpop.f32.mrb[0].mxu0
      %v876 = vadd.f32 0.0, %v875
      %v877 = vpop.f32.mrb[0].mxu0
      %878 = vmatprep.mubr.f32.mxu0 %v768
      %879 = vmatmul.mubr.f32.gmra.mrb[0].mxu0 %v766
      %v880 = vpop.f32.mrb[0].mxu0
      %v881 = vadd.f32 0.0, %v880
      %v882 = vpop.f32.mrb[0].mxu0
      %883 = vmatprep.mubr.f32.mxu0 %v772
      %884 = vmatmul.mubr.f32.gmra.mrb[0].mxu0 %v770
      %v885 = vpop.f32.mrb[0].mxu0
      %v886 = vadd.f32 0.0, %v885
      %v887 = vpop.f32.mrb[0].mxu0
      %888 = vmatprep.mubr.f32.mxu0 %v776
      %889 = vmatmul.mubr.f32.gmra.mrb[0].mxu0 %v774
      %v890 = vpop.f32.mrb[0].mxu0
      %v891 = vadd.f32 0.0, %v890
      %v892 = vpop.f32.mrb[0].mxu0
      %893 = vdwg.mxu0
      %v894 = vrcp.pop %v876
      %v895 = vrcp.pop %v881
      %v896 = vrcp.pop %v886
      %v897 = vrcp.pop %v891
      %899 = vset.pattern.permute.xlu0 0
      %900 = vperm.xlu0 %899, %v894
      %v901 = vpop.permute.xlu0 %900
      %904 = vset.pattern.permute.xlu0 0
      %905 = vperm.xlu0 %904, %v895
      %v906 = vpop.permute.xlu0 %905
      %909 = vset.pattern.permute.xlu0 0
      %910 = vperm.xlu0 %909, %v896
      %v911 = vpop.permute.xlu0 %910
      %914 = vset.pattern.permute.xlu0 0
      %915 = vperm.xlu0 %914, %v897
      %v916 = vpop.permute.xlu0 %915
      %v918 = vmul.f32 %v762, %v901
      %v919 = vmul.f32 %v764, %v901
      %v920 = vmul.f32 %v766, %v906
      %v921 = vmul.f32 %v768, %v906
      %v922 = vmul.f32 %v770, %v911
      %v923 = vmul.f32 %v772, %v911
      %v924 = vmul.f32 %v774, %v916
      %v925 = vmul.f32 %v776, %v916
      %v926 = vmul.f32 %v876, %v901
      %v927 = vmul.f32 %v881, %v906
      %v928 = vmul.f32 %v886, %v911
      %v929 = vmul.f32 %v891, %v916
      %930 = vst [vmem:[%s392] sm:$0xff] %v918
      %931 = vst [vmem:[%s392 + $0x8] sm:$0xff] %v919
      %932 = vst [vmem:[%s392 + $0x10] sm:$0xff] %v920
      %933 = vst [vmem:[%s392 + $0x18] sm:$0xff] %v921
      %934 = vst [vmem:[%s405] sm:$0xff] %v922
      %935 = vst [vmem:[%s405 + $0x8] sm:$0xff] %v923
      %936 = vst [vmem:[%s405 + $0x10] sm:$0xff] %v924
      %937 = vst [vmem:[%s405 + $0x18] sm:$0xff] %v925
      %938 = vst [vmem:[%s385] sm:$0xff] %v926
      %939 = vst [vmem:[%s385 + $0x8] sm:$0xff] %v927
      %940 = vst [vmem:[%s398] sm:$0xff] %v928
      %941 = vst [vmem:[%s398 + $0x8] sm:$0xff] %v929
      %s942 = smul.u32 2, %s22
      %p943 = scmp.lt.s32.totalorder %s942, 5
      %s944 = scalar_select %p943, %s942, 5
      %s945 = smul.addr %s944, 8
      %s946 = scalar_lea.vmem %s7, %s945
      %s947 = smul.u32 2, %s22
      %p948 = scmp.lt.s32.totalorder %s947, 5
      %s949 = scalar_select %p948, %s947, 5
      %s950 = smul.addr %s949, 2
      %s951 = smul.addr %s950, 8
      %s952 = scalar_lea.vmem %s8, %s951
      %s953 = smul.u32 2, %s22
      %p954 = scmp.lt.s32.totalorder %s953, 5
      %s955 = scalar_select %p954, %s953, 5
      %s956 = smul.addr %s955, 8
      %s957 = scalar_lea.vmem %s9, %s956
      %s958 = smul.u32 2, %s22
      %p959 = scmp.lt.s32.totalorder %s958, 5
      %s960 = scalar_select %p959, %s958, 5
      %s961 = smul.addr %s960, 2
      %s962 = smul.addr %s961, 8
      %s963 = scalar_lea.vmem %s10, %s962
      // Predicated region
      $region49: #{network_forward.1} parent=47 // pred_check
        %p964 = pneg %p192
      $region50: #{network_forward.1} parent=47 // pred_check_branch
        %966 = sbr.rel (%p964) target = $region52
      $region51: #{network_forward.1} parent=47 // pred_region
        %s967 = smul.u32 2, %s22
      $region52: #{network_forward.1} parent=47 // pred_fallthru
        _
      // Predicated region
      $region53: #{network_forward.1} parent=47 // pred_check
        %p968 = pneg %p218
      $region54: #{network_forward.1} parent=47 // pred_check_branch
        %970 = sbr.rel (%p968) target = $region56
      $region55: #{network_forward.1} parent=47 // pred_region
        %s971 = smul.u32 2, %s22
      $region56: #{network_forward.1} parent=47 // pred_fallthru
        _
      // Predicated region
      $region57: #{network_forward.1} parent=47 // pred_check
        %p972 = pneg %p244
      $region58: #{network_forward.1} parent=47 // pred_check_branch
        %974 = sbr.rel (%p972) target = $region60
      $region59: #{network_forward.1} parent=47 // pred_region
        %s975 = smul.u32 2, %s22
      $region60: #{network_forward.1} parent=47 // pred_fallthru
        _
      // Predicated region
      $region61: #{network_forward.1} parent=47 // pred_check
        %p976 = pneg %p270
      $region62: #{network_forward.1} parent=47 // pred_check_branch
        %978 = sbr.rel (%p976) target = $region64
      $region63: #{network_forward.1} parent=47 // pred_region
        %s979 = smul.u32 2, %s22
      $region64: #{network_forward.1} parent=47 // pred_fallthru
        _
    $region48: #{network_forward.1} parent=5 // pred_fallthru
      _
    %p980 = scmp.le.s32.totalorder 2, %s17
    // Predicated region
    $region65: #{network_forward.1} parent=5 // pred_check
      %p981 = pneg %p980
    $region66: #{network_forward.1} parent=5 // pred_check_branch
      %983 = sbr.rel (%p981) target = $region68
    $region67: #{network_forward.1} parent=5 // pred_region
      %s984 = ssub.s32 %s17, 2
      // Predicated region
      $region69: #{network_forward.1} parent=67 // pred_check
        %p985 = pneg %p198
      $region70: #{network_forward.1} parent=67 // pred_check_branch
        %987 = sbr.rel (%p985) target = $region72
      $region71: #{network_forward.1} parent=67 // pred_region
        %s988 = smul.u32 2, %s23
        %p989 = scmp.lt.s32.totalorder %s988, 5
        %s990 = scalar_select %p989, %s988, 5
        %s991 = smul.addr %s990, 8
        %s992 = scalar_lea.vmem %s7, %s991
      $region72: #{network_forward.1} parent=67 // pred_fallthru
        _
      // Predicated region
      $region73: #{network_forward.1} parent=67 // pred_check
        %p993 = pneg %p224
      $region74: #{network_forward.1} parent=67 // pred_check_branch
        %995 = sbr.rel (%p993) target = $region76
      $region75: #{network_forward.1} parent=67 // pred_region
        %s996 = smul.u32 2, %s23
        %p997 = scmp.lt.s32.totalorder %s996, 5
        %s998 = scalar_select %p997, %s996, 5
        %s999 = smul.addr %s998, 2
        %s1000 = smul.addr %s999, 8
        %s1001 = scalar_lea.vmem %s8, %s1000
      $region76: #{network_forward.1} parent=67 // pred_fallthru
        _
      // Predicated region
      $region77: #{network_forward.1} parent=67 // pred_check
        %p1002 = pneg %p250
      $region78: #{network_forward.1} parent=67 // pred_check_branch
        %1004 = sbr.rel (%p1002) target = $region80
      $region79: #{network_forward.1} parent=67 // pred_region
        %s1005 = smul.u32 2, %s23
        %p1006 = scmp.lt.s32.totalorder %s1005, 5
        %s1007 = scalar_select %p1006, %s1005, 5
        %s1008 = smul.addr %s1007, 8
        %s1009 = scalar_lea.vmem %s9, %s1008
      $region80: #{network_forward.1} parent=67 // pred_fallthru
        _
      // Predicated region
      $region81: #{network_forward.1} parent=67 // pred_check
        %p1010 = pneg %p276
      $region82: #{network_forward.1} parent=67 // pred_check_branch
        %1012 = sbr.rel (%p1010) target = $region84
      $region83: #{network_forward.1} parent=67 // pred_region
        %s1013 = smul.u32 2, %s23
        %p1014 = scmp.lt.s32.totalorder %s1013, 5
        %s1015 = scalar_select %p1014, %s1013, 5
        %s1016 = smul.addr %s1015, 2
        %s1017 = smul.addr %s1016, 8
        %s1018 = scalar_lea.vmem %s10, %s1017
      $region84: #{network_forward.1} parent=67 // pred_fallthru
        _
    $region68: #{network_forward.1} parent=5 // pred_fallthru
      _
  $region6: #{network_forward.1} parent=0 // loop_footer
    %s21 = sadd.s32 1, %s17
  $region7: #{network_forward.1} parent=0 // loop_footer_branch
    %16 = sbr.rel target = $region3
  $region8: #{network_forward.1} parent=0 // loop_exit
    _

</llo_original>
